<compile_context>
chip_gen: v6e
topology: v6e:2x2x1
jax: 0.10.0
libtpu: 0.0.40
codegen_flags: <defaults>
</compile_context>

<pallas_src>
import functools

import jax
import jax.numpy as jnp
from jax.experimental import pallas as pl
from jax.experimental.pallas import tpu as pltpu


def _round_up(x, m):
    return (x + m - 1) // m * m


def _vqa_kernel(pooled_ref, q_ref, w_img_ref, w_q_ref, b_ref, out_ref):
    # One answer-column tile per grid step:
    #   logits[:, tile] = pooled @ W_img_eff[:, tile]
    #                   + q      @ W_q_eff[:, tile] + b_eff[:, tile]
    acc = jnp.dot(pooled_ref[...], w_img_ref[...],
                  preferred_element_type=jnp.float32)
    acc = acc + jnp.dot(q_ref[...], w_q_ref[...],
                        preferred_element_type=jnp.float32)
    out_ref[...] = acc + b_ref[...]


@functools.partial(jax.jit, static_argnames=("num_a_words",))
def simple_baseline_net(image, question_encoding, folded_params, *, num_a_words):
    B = image.shape[0]

    # GoogLeNet-tail approximation, stage 1: global average pool in plain XLA
    # (f32 accumulation) -- the kernel never touches the NCHW image.
    pooled = jnp.mean(image.astype(jnp.float32), axis=(2, 3))        # (B, C)

    w_img = folded_params["w_img_eff"]      # (C_pad, A_pad) bf16
    w_q = folded_params["w_q_eff"]          # (Q,     A_pad) bf16
    b = folded_params["b_eff"]              # (1,     A_pad) f32
    c_pad = w_img.shape[0]
    a_pad = w_img.shape[1]
    q_dim = w_q.shape[0]

    b_pad = _round_up(B, 8)                 # sublane-align the MXU M dim
    pooled = jnp.pad(pooled, ((0, b_pad - B), (0, c_pad - pooled.shape[1])))
    q = jnp.pad(question_encoding.astype(jnp.float32), ((0, b_pad - B), (0, 0)))
    pooled = pooled.astype(jnp.bfloat16)    # MXU operands in bf16
    q = q.astype(jnp.bfloat16)

    # Answer-column tile: largest multiple of 128 (<= 512) that divides a_pad.
    tn = min(512, a_pad)
    while a_pad % tn:
        tn -= 128
    grid = (a_pad // tn,)

    out = pl.pallas_call(
        _vqa_kernel,
        out_shape=jax.ShapeDtypeStruct((b_pad, a_pad), jnp.float32),
        grid=grid,
        in_specs=[
            pl.BlockSpec((b_pad, c_pad), lambda j: (0, 0)),   # resident
            pl.BlockSpec((b_pad, q_dim), lambda j: (0, 0)),   # resident
            pl.BlockSpec((c_pad, tn), lambda j: (0, j)),      # pipelined tiles
            pl.BlockSpec((q_dim, tn), lambda j: (0, j)),
            pl.BlockSpec((1, tn), lambda j: (0, j)),
        ],
        out_specs=pl.BlockSpec((b_pad, tn), lambda j: (0, j)),
        compiler_params=pltpu.CompilerParams(
            dimension_semantics=("parallel",),   # v7x: 2 TCs split the tiles
            vmem_limit_bytes=64 * 1024 * 1024),
    )(pooled, q, w_img, w_q, b)

    return out[:B, :num_a_words]


def init_params(key, *, in_channels, num_q_words, num_a_words, hidden=1024):
    """Original (unfolded) module-style parameters in f32 (used by the reference)."""
    ks = jax.random.split(key, 6)
    scale = 0.02
    return {
        # synthetic GoogLeNet tail, stage 2: pooled channels -> 1024 features
        "w_img": scale * jax.random.normal(ks[0], (in_channels, hidden), jnp.float32),
        "b_img": jnp.zeros((1, hidden), jnp.float32),
        # word_feature_extractor = nn.Linear(num_q_words, 1024)
        "w_q": scale * jax.random.normal(ks[1], (num_q_words, hidden), jnp.float32),
        "b_q": scale * jax.random.normal(ks[2], (1, hidden), jnp.float32),
        # classifier = nn.Linear(2048, num_a_words), split into [img | word]
        "w_c_img": scale * jax.random.normal(ks[3], (hidden, num_a_words), jnp.float32),
        "w_c_word": scale * jax.random.normal(ks[4], (hidden, num_a_words), jnp.float32),
        "b_c": scale * jax.random.normal(ks[5], (1, num_a_words), jnp.float32),
    }


def fold_params(params, *, lane=128, sublane=8):
    """One-time host-side fold of the two affine stages into one, bf16 cast,
    answer dim padded to a lane multiple and image-K dim to a sublane multiple."""
    w_img_eff = params["w_img"] @ params["w_c_img"]                    # (C, A)
    w_q_eff = params["w_q"] @ params["w_c_word"]                       # (Q, A)
    b_eff = (params["b_img"] @ params["w_c_img"]
             + params["b_q"] @ params["w_c_word"] + params["b_c"])     # (1, A)

    c, a = w_img_eff.shape
    a_pad = _round_up(a, lane)
    c_pad = _round_up(c, sublane)
    w_img_eff = jnp.pad(w_img_eff, ((0, c_pad - c), (0, a_pad - a)))
    w_q_eff = jnp.pad(w_q_eff, ((0, 0), (0, a_pad - a)))
    b_eff = jnp.pad(b_eff, ((0, 0), (0, a_pad - a)))
    return {
        "w_img_eff": w_img_eff.astype(jnp.bfloat16),
        "w_q_eff": w_q_eff.astype(jnp.bfloat16),
        "b_eff": b_eff.astype(jnp.float32),
    }


def _reference(image, question_encoding, params):
    """Pure-JAX f32 reference following the original module math."""
    pooled = jnp.mean(image, axis=(2, 3))
    img_feat = pooled @ params["w_img"] + params["b_img"]
    word_feat = question_encoding @ params["w_q"] + params["b_q"]
    cat = jnp.concatenate([img_feat, word_feat], axis=1)
    w_c = jnp.concatenate([params["w_c_img"], params["w_c_word"]], axis=0)
    return cat @ w_c + params["b_c"]


if __name__ == "__main__":
    B, C, H, W = 2, 3, 16, 16
    num_q_words, num_a_words = 32, 1000   # answer dim padded to 1024 internally

    key = jax.random.PRNGKey(0)
    k_img, k_q, k_p = jax.random.split(key, 3)

    image = jax.random.normal(k_img, (B, C, H, W), jnp.float32)
    question_encoding = jax.random.normal(k_q, (B, num_q_words), jnp.float32)

    params = init_params(k_p, in_channels=C,
                         num_q_words=num_q_words, num_a_words=num_a_words)
    folded = fold_params(params)          # one-time host-side precompute

    logits = simple_baseline_net(image, question_encoding, folded,
                                 num_a_words=num_a_words)
    logits = jax.block_until_ready(logits)

    ref = _reference(image, question_encoding, params)
    assert logits.shape == (B, num_a_words), logits.shape
    assert jnp.allclose(logits, ref, atol=5e-3, rtol=5e-2), (
        float(jnp.max(jnp.abs(logits - ref))))
    print("KERNEL_OK")
</pallas_src>

<mosaic_0001>
module attributes {stable_mosaic.version = 11 : i64} {
  func.func @_vqa_kernel(%arg0: i32, %arg1: memref<8x8xbf16, #tpu.memory_space<vmem>>, %arg2: memref<8x32xbf16, #tpu.memory_space<vmem>>, %arg3: memref<8x512xbf16, #tpu.memory_space<vmem>>, %arg4: memref<32x512xbf16, #tpu.memory_space<vmem>>, %arg5: memref<1x512xf32, #tpu.memory_space<vmem>>, %arg6: memref<8x512xf32, #tpu.memory_space<vmem>>) attributes {dimension_semantics = [#tpu.dimension_semantics<parallel>], iteration_bounds = array<i64: 2>, scalar_prefetch = 0 : i64, scratch_operands = 0 : i64, tpu.core_type = #tpu.core_type<tc>, window_params = [{pipeline_mode = #tpu.pipeline_mode<synchronous>, transform_indices = @transform_0, window_bounds = array<i64: 8, 8>}, {pipeline_mode = #tpu.pipeline_mode<synchronous>, transform_indices = @transform_1, window_bounds = array<i64: 8, 32>}, {transform_indices = @transform_2, window_bounds = array<i64: 8, 512>}, {transform_indices = @transform_3, window_bounds = array<i64: 32, 512>}, {transform_indices = @transform_4, window_bounds = array<i64: 1, 512>}, {transform_indices = @transform_5, window_bounds = array<i64: 8, 512>}]} {
    %c0 = arith.constant 0 : index
    %c0_0 = arith.constant 0 : index
    %0 = vector.load %arg1[%c0, %c0_0] : memref<8x8xbf16, #tpu.memory_space<vmem>>, vector<8x8xbf16>
    %c0_1 = arith.constant 0 : index
    %c0_2 = arith.constant 0 : index
    %1 = vector.load %arg3[%c0_1, %c0_2] : memref<8x512xbf16, #tpu.memory_space<vmem>>, vector<8x512xbf16>
    %cst = arith.constant dense<0.000000e+00> : vector<8x512xf32>
    %2 = tpu.matmul %0, %1, %cst {dimension_numbers = #tpu.dot_dimension_numbers<[1], [0], [0], [1], [0, 0, 1, 1], [], []>} : vector<8x8xbf16>, vector<8x512xbf16>, vector<8x512xf32> -> vector<8x512xf32>
    %c0_3 = arith.constant 0 : index
    %c0_4 = arith.constant 0 : index
    %3 = vector.load %arg2[%c0_3, %c0_4] : memref<8x32xbf16, #tpu.memory_space<vmem>>, vector<8x32xbf16>
    %c0_5 = arith.constant 0 : index
    %c0_6 = arith.constant 0 : index
    %4 = vector.load %arg4[%c0_5, %c0_6] : memref<32x512xbf16, #tpu.memory_space<vmem>>, vector<32x512xbf16>
    %cst_7 = arith.constant dense<0.000000e+00> : vector<8x512xf32>
    %5 = tpu.matmul %3, %4, %cst_7 {dimension_numbers = #tpu.dot_dimension_numbers<[1], [0], [0], [1], [0, 0, 1, 1], [], []>} : vector<8x32xbf16>, vector<32x512xbf16>, vector<8x512xf32> -> vector<8x512xf32>
    %6 = arith.addf %2, %5 : vector<8x512xf32>
    %c0_8 = arith.constant 0 : index
    %c0_9 = arith.constant 0 : index
    %7 = vector.load %arg5[%c0_8, %c0_9] : memref<1x512xf32, #tpu.memory_space<vmem>>, vector<1x512xf32>
    %8 = vector.broadcast %7 : vector<1x512xf32> to vector<8x512xf32>
    %9 = arith.addf %6, %8 : vector<8x512xf32>
    %c0_10 = arith.constant 0 : index
    %c0_11 = arith.constant 0 : index
    %10 = vector.load %arg6[%c0_10, %c0_11] : memref<8x512xf32, #tpu.memory_space<vmem>>, vector<8x512xf32>
    tpu.vector_store %arg6[%c0_10, %c0_11], %9 {strides = array<i32>} : memref<8x512xf32, #tpu.memory_space<vmem>>, vector<8x512xf32>,
    return
  }
  func.func @transform_0(%arg0: i32) -> (i32, i32) {
    %c0_i32 = arith.constant 0 : i32
    %c0_i32_0 = arith.constant 0 : i32
    %c0_i32_1 = arith.constant 0 : i32
    return %c0_i32, %c0_i32_0 : i32, i32
  }
  func.func @transform_1(%arg0: i32) -> (i32, i32) {
    %c0_i32 = arith.constant 0 : i32
    %c0_i32_0 = arith.constant 0 : i32
    %c0_i32_1 = arith.constant 0 : i32
    return %c0_i32, %c0_i32_0 : i32, i32
  }
  func.func @transform_2(%arg0: i32) -> (i32, i32) {
    %c0_i32 = arith.constant 0 : i32
    %c0_i32_0 = arith.constant 0 : i32
    return %c0_i32, %arg0 : i32, i32
  }
  func.func @transform_3(%arg0: i32) -> (i32, i32) {
    %c0_i32 = arith.constant 0 : i32
    %c0_i32_0 = arith.constant 0 : i32
    return %c0_i32, %arg0 : i32, i32
  }
  func.func @transform_4(%arg0: i32) -> (i32, i32) {
    %c0_i32 = arith.constant 0 : i32
    %c0_i32_0 = arith.constant 0 : i32
    return %c0_i32, %arg0 : i32, i32
  }
  func.func @transform_5(%arg0: i32) -> (i32, i32) {
    %c0_i32 = arith.constant 0 : i32
    %c0_i32_0 = arith.constant 0 : i32
    return %c0_i32, %arg0 : i32, i32
  }
}

</mosaic_0001>

<llo_original>
// kernel: simple_baseline_net.1
$region0: #{simple_baseline_net.1}
  #allocation0 [shape = 'u32[]', space=smem, size = 0x4, offset = 0x4, fixed_abs, tag = 'smem constant byte address 0x4 - core index']
  #allocation1 [shape = 'u32[144,128]{1,0:T(1,128)}', space=vmem, size = 0x12000, scoped, tag = 'internal scratch']
  %s0 = inlined_call_operand.vmem [shape: bf16[8,8], index: 0, kind: input, shape index: {}]
  %s1 = inlined_call_operand.vmem [shape: bf16[8,32], index: 1, kind: input, shape index: {}]
  %s2 = inlined_call_operand.vmem [shape: bf16[8,1024], index: 2, kind: input, shape index: {}]
  %s3 = inlined_call_operand.hbm [shape: bf16[32,1024], index: 3, kind: input, shape index: {}]
  %s4 = inlined_call_operand.vmem [shape: f32[1,1024], index: 4, kind: input, shape index: {}]
  %s5 = inlined_call_operand.vmem [shape: f32[8,1024], index: 5, kind: output, shape index: {}]
  %s6 = sld [smem:[#allocation0]]
  $region57: #{simple_baseline_net.1} parent=0
    _
  %s8 = ssub.s32 1, %s6
  %s9 = scalar_select 0, %s8, %s6
  $region1: #{simple_baseline_net.1} parent=0
    #allocation2 [shape = 'u8[65536]{0}', space=vmem, size = 0x10000, scoped, tag = 'input window, operand 3']
    #allocation3 [shape = 's32[2]{0}', space=sflag, size = 0x8, scoped, tag = 'scoped memory for simple_baseline_net.1']
    %10 = vsyncpa [#allocation3], 0
    %s11 = scalar_lea.sflag [#allocation3], 1
    %12 = vsyncpa %s11, 0
    loop: start=0, step=1, limit=4
    $region2: #{simple_baseline_net.1} parent=1 // loop_pre_header
      _
    $region3: #{simple_baseline_net.1} parent=1 // loop_header
      %s14 = sphi 0, %s18
      %p15 = scmp.ge.s32.totalorder %s14, 4
      %s22 = sphi 0, %s22
      %s24 = sphi 0, %s22
      %s25 = sphi 0, %s24
      %s39 = sphi 0, %s25
      %s43 = sphi 0, %s43
      %s45 = sphi 0, %s43
      %s46 = sphi 0, %s45
      %s60 = sphi 0, %s46
      %s66 = sphi 0, %s68
      %s69 = sphi 0, %s66
      %s70 = sphi 0, %s69
      %s86 = sphi 0, %s70
      %s92 = sphi 0, %s94
      %s95 = sphi 0, %s92
      %s96 = sphi 0, %s95
      %s112 = sphi 0, %s96
      %s118 = sphi 0, %s120
      %s121 = sphi 0, %s118
      %s122 = sphi 0, %s121
      %s138 = sphi 0, %s122
      %s144 = sphi 0, %s146
      %s147 = sphi 0, %s144
      %s148 = sphi 0, %s147
      %s164 = sphi 0, %s148
    $region4: #{simple_baseline_net.1} parent=1 // loop_header_branch
      %17 = sbr.rel (%p15) target = $region8
    $region5: #{simple_baseline_net.1} parent=1 // loop_body
      %s19 = ssub.s32 %s14, 1
      %s20 = ssub.s32 %s14, 2
      %s21 = sadd.s32 %s14, 1
      %s23 = sadd.s32 %s22, 1
      %p26 = scmp.eq.s32.totalorder %s14, 1
      %p27 = scmp.ne.s32.totalorder %s22, %s24
      %p28 = scmp.eq.s32.totalorder %s14, 0
      %p29 = por %p27, %p28
      %p30 = scmp.ne.s32.totalorder %s22, %s24
      %p31 = scmp.eq.s32.totalorder %s19, 1
      %p32 = por %p30, %p31
      %p33 = scmp.ne.s32.totalorder %s24, %s25
      %p34 = scmp.eq.s32.totalorder %s19, 0
      %p35 = por %p33, %p34
      %p36 = scmp.ne.s32.totalorder %s24, %s25
      %p37 = scmp.eq.s32.totalorder %s20, 1
      %p38 = por %p36, %p37
      %p40 = scmp.ne.s32.totalorder %s25, %s39
      %p41 = scmp.eq.s32.totalorder %s20, 0
      %p42 = por %p40, %p41
      %s44 = sadd.s32 %s43, 1
      %p47 = scmp.eq.s32.totalorder %s14, 1
      %p48 = scmp.ne.s32.totalorder %s43, %s45
      %p49 = scmp.eq.s32.totalorder %s14, 0
      %p50 = por %p48, %p49
      %p51 = scmp.ne.s32.totalorder %s43, %s45
      %p52 = scmp.eq.s32.totalorder %s19, 1
      %p53 = por %p51, %p52
      %p54 = scmp.ne.s32.totalorder %s45, %s46
      %p55 = scmp.eq.s32.totalorder %s19, 0
      %p56 = por %p54, %p55
      %p57 = scmp.ne.s32.totalorder %s45, %s46
      %p58 = scmp.eq.s32.totalorder %s20, 1
      %p59 = por %p57, %p58
      %p61 = scmp.ne.s32.totalorder %s46, %s60
      %p62 = scmp.eq.s32.totalorder %s20, 0
      %p63 = por %p61, %p62
      %s64 = ssub.s32 %s14, %s21
      %p65 = scmp.eq.s32.totalorder %s64, 0
      %s67 = sadd.s32 %s66, 1
      %s68 = scalar_select %p65, %s66, %s67
      %p71 = pneg %p65
      %p72 = scmp.eq.s32.totalorder %s14, 1
      %p73 = por %p71, %p72
      %p74 = scmp.ne.s32.totalorder %s66, %s69
      %p75 = scmp.eq.s32.totalorder %s14, 0
      %p76 = por %p74, %p75
      %p77 = scmp.ne.s32.totalorder %s66, %s69
      %p78 = scmp.eq.s32.totalorder %s19, 1
      %p79 = por %p77, %p78
      %p80 = scmp.ne.s32.totalorder %s69, %s70
      %p81 = scmp.eq.s32.totalorder %s19, 0
      %p82 = por %p80, %p81
      %p83 = scmp.ne.s32.totalorder %s69, %s70
      %p84 = scmp.eq.s32.totalorder %s20, 1
      %p85 = por %p83, %p84
      %p87 = scmp.ne.s32.totalorder %s70, %s86
      %p88 = scmp.eq.s32.totalorder %s20, 0
      %p89 = por %p87, %p88
      %s90 = ssub.s32 %s14, %s21
      %p91 = scmp.eq.s32.totalorder %s90, 0
      %s93 = sadd.s32 %s92, 1
      %s94 = scalar_select %p91, %s92, %s93
      %p97 = pneg %p91
      %p98 = scmp.eq.s32.totalorder %s14, 1
      %p99 = por %p97, %p98
      %p100 = scmp.ne.s32.totalorder %s92, %s95
      %p101 = scmp.eq.s32.totalorder %s14, 0
      %p102 = por %p100, %p101
      %p103 = scmp.ne.s32.totalorder %s92, %s95
      %p104 = scmp.eq.s32.totalorder %s19, 1
      %p105 = por %p103, %p104
      %p106 = scmp.ne.s32.totalorder %s95, %s96
      %p107 = scmp.eq.s32.totalorder %s19, 0
      %p108 = por %p106, %p107
      %p109 = scmp.ne.s32.totalorder %s95, %s96
      %p110 = scmp.eq.s32.totalorder %s20, 1
      %p111 = por %p109, %p110
      %p113 = scmp.ne.s32.totalorder %s96, %s112
      %p114 = scmp.eq.s32.totalorder %s20, 0
      %p115 = por %p113, %p114
      %s116 = ssub.s32 %s14, %s21
      %p117 = scmp.eq.s32.totalorder %s116, 0
      %s119 = sadd.s32 %s118, 1
      %s120 = scalar_select %p117, %s118, %s119
      %p123 = pneg %p117
      %p124 = scmp.eq.s32.totalorder %s14, 1
      %p125 = por %p123, %p124
      %p126 = scmp.ne.s32.totalorder %s118, %s121
      %p127 = scmp.eq.s32.totalorder %s14, 0
      %p128 = por %p126, %p127
      %p129 = scmp.ne.s32.totalorder %s118, %s121
      %p130 = scmp.eq.s32.totalorder %s19, 1
      %p131 = por %p129, %p130
      %p132 = scmp.ne.s32.totalorder %s121, %s122
      %p133 = scmp.eq.s32.totalorder %s19, 0
      %p134 = por %p132, %p133
      %p135 = scmp.ne.s32.totalorder %s121, %s122
      %p136 = scmp.eq.s32.totalorder %s20, 1
      %p137 = por %p135, %p136
      %p139 = scmp.ne.s32.totalorder %s122, %s138
      %p140 = scmp.eq.s32.totalorder %s20, 0
      %p141 = por %p139, %p140
      %s142 = ssub.s32 %s14, %s21
      %p143 = scmp.eq.s32.totalorder %s142, 0
      %s145 = sadd.s32 %s144, 1
      %s146 = scalar_select %p143, %s144, %s145
      %p149 = pneg %p143
      %p150 = scmp.eq.s32.totalorder %s14, 1
      %p151 = por %p149, %p150
      %p152 = scmp.ne.s32.totalorder %s144, %s147
      %p153 = scmp.eq.s32.totalorder %s14, 0
      %p154 = por %p152, %p153
      %p155 = scmp.ne.s32.totalorder %s144, %s147
      %p156 = scmp.eq.s32.totalorder %s19, 1
      %p157 = por %p155, %p156
      %p158 = scmp.ne.s32.totalorder %s147, %s148
      %p159 = scmp.eq.s32.totalorder %s19, 0
      %p160 = por %p158, %p159
      %p161 = scmp.ne.s32.totalorder %s147, %s148
      %p162 = scmp.eq.s32.totalorder %s20, 1
      %p163 = por %p161, %p162
      %p165 = scmp.ne.s32.totalorder %s148, %s164
      %p166 = scmp.eq.s32.totalorder %s20, 0
      %p167 = por %p165, %p166
      %p168 = scmp.le.s32.totalorder 1, %s14
      %p169 = scmp.lt.s32.totalorder %s14, 3
      %p170 = pnand %p168, %p169
      %p171 = pneg %p170
      // Predicated region
      $region9: #{simple_baseline_net.1} parent=5 // pred_check
        _
      $region10: #{simple_baseline_net.1} parent=5 // pred_check_branch
        %173 = sbr.rel (%p170) target = $region12
      $region11: #{simple_baseline_net.1} parent=5 // pred_region
        %s174 = ssub.s32 %s14, 1
        // Predicated region
        $region13: #{simple_baseline_net.1} parent=11 // pred_check
          %p175 = pneg %p35
        $region14: #{simple_baseline_net.1} parent=11 // pred_check_branch
          %177 = sbr.rel (%p175) target = $region16
        $region15: #{simple_baseline_net.1} parent=11 // pred_region
          _
        $region16: #{simple_baseline_net.1} parent=11 // pred_fallthru
          _
        // Predicated region
        $region17: #{simple_baseline_net.1} parent=11 // pred_check
          %p178 = pneg %p56
        $region18: #{simple_baseline_net.1} parent=11 // pred_check_branch
          %180 = sbr.rel (%p178) target = $region20
        $region19: #{simple_baseline_net.1} parent=11 // pred_region
          _
        $region20: #{simple_baseline_net.1} parent=11 // pred_fallthru
          _
      $region12: #{simple_baseline_net.1} parent=5 // pred_fallthru
        _
      %p181 = scmp.lt.s32.totalorder %s14, 2
      // Predicated region
      $region21: #{simple_baseline_net.1} parent=5 // pred_check
        %p182 = pneg %p181
      $region22: #{simple_baseline_net.1} parent=5 // pred_check_branch
        %184 = sbr.rel (%p182) target = $region24
      $region23: #{simple_baseline_net.1} parent=5 // pred_region
        // Predicated region
        $region25: #{simple_baseline_net.1} parent=23 // pred_check
          %p185 = pneg %p76
        $region26: #{simple_baseline_net.1} parent=23 // pred_check_branch
          %187 = sbr.rel (%p185) target = $region28
        $region27: #{simple_baseline_net.1} parent=23 // pred_region
          %s188 = smul.u32 4, %s14
          %p189 = scmp.lt.s32.totalorder %s188, 7
          %s190 = scalar_select %p189, %s188, 7
          %s191 = smul.addr %s190, 4
          %s192 = scalar_lea.vmem %s2, %s191
          %s193 = smul.u32 4, %s14
        $region28: #{simple_baseline_net.1} parent=23 // pred_fallthru
          _
        // Predicated region
        $region29: #{simple_baseline_net.1} parent=23 // pred_check
          %p194 = pneg %p102
        $region30: #{simple_baseline_net.1} parent=23 // pred_check_branch
          %196 = sbr.rel (%p194) target = $region32
        $region31: #{simple_baseline_net.1} parent=23 // pred_region
          %s197 = sand.u32 %s92, 1
          %s198 = scalar_lea.sflag [#allocation3], %s197
          %s199 = sand.u32 %s92, 1
          %s200 = smul.addr %s199, 64
          %s201 = scalar_lea.vmem [#allocation2], %s200
          %s202 = smul.u32 4, %s14
          %s204 = ssub.s32 1024, 1024
          %205 = vsyncadd %s198, %s204
          %s206 = smul.addr %s202, 64
          %s207 = scalar_lea.hbm %s3, %s206
          %s208 = sshll.u32 %s201, 4
          %s209 = int_to_ptr.vmem [resolvable:$true] %s208
          %214 = dma.hbm_to_vmem [thread:$0]  %s207, 1024, %s209, %s198, 512, 256, 16
        $region32: #{simple_baseline_net.1} parent=23 // pred_fallthru
          _
        // Predicated region
        $region33: #{simple_baseline_net.1} parent=23 // pred_check
          %p215 = pneg %p128
        $region34: #{simple_baseline_net.1} parent=23 // pred_check_branch
          %217 = sbr.rel (%p215) target = $region36
        $region35: #{simple_baseline_net.1} parent=23 // pred_region
          %s218 = smul.u32 4, %s14
          %p219 = scmp.lt.s32.totalorder %s218, 7
          %s220 = scalar_select %p219, %s218, 7
          %s221 = scalar_lea.vmem %s4, %s220
          %s222 = smul.u32 4, %s14
        $region36: #{simple_baseline_net.1} parent=23 // pred_fallthru
          _
      $region24: #{simple_baseline_net.1} parent=5 // pred_fallthru
        _
      %p223 = scmp.le.s32.totalorder 1, %s14
      %p224 = scmp.lt.s32.totalorder %s14, 3
      %p225 = pnand %p223, %p224
      %p226 = pneg %p225
      // Predicated region
      $region37: #{simple_baseline_net.1} parent=5 // pred_check
        _
      $region38: #{simple_baseline_net.1} parent=5 // pred_check_branch
        %228 = sbr.rel (%p225) target = $region40
      $region39: #{simple_baseline_net.1} parent=5 // pred_region
        %s229 = ssub.s32 %s14, 1
        %s230 = sand.u32 %s95, 1
        %s231 = scalar_lea.sflag [#allocation3], %s230
        %s232 = sand.u32 %s95, 1
        %s233 = smul.addr %s232, 64
        %s234 = scalar_lea.vmem [#allocation2], %s233
        // Predicated region
        $region41: #{simple_baseline_net.1} parent=39 // pred_check
          %p235 = pneg %p108
        $region42: #{simple_baseline_net.1} parent=39 // pred_check_branch
          %237 = sbr.rel (%p235) target = $region44
        $region43: #{simple_baseline_net.1} parent=39 // pred_region
          %238 = dma.done %s231, 1024
        $region44: #{simple_baseline_net.1} parent=39 // pred_fallthru
          _
        %p239 = pneg %p35
        %p240 = pneg %p32
        %p241 = pneg %p56
        %p242 = pneg %p53
        %s243 = smul.u32 4, %s19
        %p244 = scmp.lt.s32.totalorder %s243, 7
        %s245 = scalar_select %p244, %s243, 7
        %s246 = smul.addr %s245, 4
        %s247 = scalar_lea.vmem %s2, %s246
        %p248 = pneg %p82
        %p249 = pneg %p79
        %s250 = sand.u32 %s95, 1
        %s251 = scalar_lea.sflag [#allocation3], %s250
        %s252 = sand.u32 %s95, 1
        %s253 = smul.addr %s252, 64
        %s254 = scalar_lea.vmem [#allocation2], %s253
        %p255 = pneg %p108
        %p256 = pneg %p105
        %s257 = smul.u32 4, %s19
        %p258 = scmp.lt.s32.totalorder %s257, 7
        %s259 = scalar_select %p258, %s257, 7
        %s260 = scalar_lea.vmem %s4, %s259
        %p261 = pneg %p134
        %p262 = pneg %p131
        %p263 = pneg %p160
        %p264 = pneg %p157
        %s265 = smul.u32 4, %s19
        %p266 = scmp.lt.s32.totalorder %s265, 7
        %s267 = scalar_select %p266, %s265, 7
        %s268 = smul.addr %s267, 8
        %s269 = scalar_lea.vmem %s5, %s268
        %s270 = smul.u32 4, %s19
        %p271 = scmp.lt.s32.totalorder %s270, 7
        %s272 = scalar_select %p271, %s270, 7
        %s273 = smul.addr %s272, 4
        %s274 = scalar_lea.vmem %s2, %s273
        %s275 = smul.u32 4, %s19
        %s276 = smul.u32 4, %s19
        %s277 = smul.u32 4, %s19
        %p278 = scmp.lt.s32.totalorder %s277, 7
        %s279 = scalar_select %p278, %s277, 7
        %s280 = scalar_lea.vmem %s4, %s279
        %s281 = smul.u32 4, %s19
        %s282 = smul.u32 4, %s19
        %p283 = scmp.lt.s32.totalorder %s282, 7
        %s284 = scalar_select %p283, %s282, 7
        %s285 = smul.addr %s284, 8
        %s286 = scalar_lea.vmem %s5, %s285
        %s287 = smul.u32 4, %s19
        %v289 = vld [vmem:[%s0] sm:$0xf]
        %v290 = vld [vmem:[%s274] sm:$0xff]
        %v291 = vld [vmem:[%s274 + $0x8] sm:$0xff]
        %v292 = vld [vmem:[%s1] sm:$0xf]
        %v293 = vld [vmem:[%s234] sm:$0xff]
        %v294 = vld [vmem:[%s234 + $0x8] sm:$0xff]
        %v295 = vld [vmem:[%s234 + $0x10] sm:$0xff]
        %v296 = vld [vmem:[%s234 + $0x18] sm:$0xff]
        %v297 = vld [vmem:[%s234 + $0x20] sm:$0xff]
        %v298 = vld [vmem:[%s234 + $0x28] sm:$0xff]
        %v299 = vld [vmem:[%s234 + $0x30] sm:$0xff]
        %v300 = vld [vmem:[%s234 + $0x38] sm:$0xff]
        %v309 = vunpack.c.l.b16 %v293
        %v310 = vunpack.c.h.b16 %v293
        %v311 = vunpack.c.l.b16 %v294
        %v312 = vunpack.c.h.b16 %v294
        %v313 = vunpack.c.l.b16 %v295
        %v314 = vunpack.c.h.b16 %v295
        %v315 = vunpack.c.l.b16 %v296
        %v316 = vunpack.c.h.b16 %v296
        %v317 = vunpack.c.l.b16 %v297
        %v318 = vunpack.c.h.b16 %v297
        %v319 = vunpack.c.l.b16 %v298
        %v320 = vunpack.c.h.b16 %v298
        %v321 = vunpack.c.l.b16 %v299
        %v322 = vunpack.c.h.b16 %v299
        %v323 = vunpack.c.l.b16 %v300
        %v324 = vunpack.c.h.b16 %v300
        %v325 = vpack.c.b16 %v313, %v309
        %v326 = vpack.c.b16 %v314, %v310
        %v327 = vpack.c.b16 %v315, %v311
        %v328 = vpack.c.b16 %v316, %v312
        %v329 = vpack.c.b16 %v321, %v317
        %v330 = vpack.c.b16 %v322, %v318
        %v331 = vpack.c.b16 %v323, %v319
        %v332 = vpack.c.b16 %v324, %v320
        %vm341 = vcmask 261120
        %v343 = vsel %vm341, %v292, 0
        %345 = vmatprep.subr.bf16.mxu0 0
        %346 = vmatpush1.bf16.msra.mxu0 0
        %347 = vmatprep.subr.bf16.mxu0 0
        %348 = vmatpush1.bf16.msra.mxu0 0
        %349 = vmatprep.subr.bf16.mxu0 0
        %350 = vmatpush1.bf16.msra.mxu0 0
        %351 = vmatprep.subr.bf16.mxu0 0
        %352 = vmatpush1.bf16.msra.mxu0 0
        %353 = vmatprep.subr.bf16.mxu0 0
        %354 = vmatpush1.bf16.msra.mxu0 0
        %355 = vmatprep.subr.bf16.mxu0 0
        %356 = vmatpush1.bf16.msra.mxu0 0
        %357 = vmatprep.subr.bf16.mxu0 %v330
        %358 = vmatpush1.bf16.msra.mxu0 %v329
        %359 = vmatprep.subr.bf16.mxu0 %v326
        %360 = vmatpush1.bf16.msra.mxu0 %v325
        %361 = vmatprep.subr.bf16.mxu0 0
        %362 = vmatpush2.bf16.msra.mxu0 0
        %363 = vmatprep.subr.bf16.mxu0 0
        %364 = vmatpush2.bf16.msra.mxu0 0
        %365 = vmatprep.subr.bf16.mxu0 0
        %366 = vmatpush2.bf16.msra.mxu0 0
        %367 = vmatprep.subr.bf16.mxu0 0
        %368 = vmatpush2.bf16.msra.mxu0 0
        %369 = vmatprep.subr.bf16.mxu0 0
        %370 = vmatpush2.bf16.msra.mxu0 0
        %371 = vmatprep.subr.bf16.mxu0 0
        %372 = vmatpush2.bf16.msra.mxu0 0
        %373 = vmatprep.subr.bf16.mxu0 0
        %374 = vmatpush2.bf16.msra.mxu0 0
        %375 = vmatprep.subr.bf16.mxu0 0
        %376 = vmatpush2.bf16.msra.mxu0 0
        %377 = vmatprep.mubr.bf16.mxu0 0
        %378 = vmatmul.mubr.bf16.gmra.mxu0 %v343
        %v379 = vpop.f32.mrf.mxu0
        %v380 = vadd.f32 0.0, %v379
        %v381 = vpop.f32.mrf.mxu0
        %v382 = vadd.f32 0.0, %v381
        %v383 = vpop.f32.mrf.mxu0
        %v384 = vpop.f32.mrf.mxu0
        %385 = vdwg.mxu0
        %386 = vmatprep.subr.bf16.mxu0 0
        %387 = vmatpush1.bf16.msra.mxu0 0
        %388 = vmatprep.subr.bf16.mxu0 0
        %389 = vmatpush1.bf16.msra.mxu0 0
        %390 = vmatprep.subr.bf16.mxu0 0
        %391 = vmatpush1.bf16.msra.mxu0 0
        %392 = vmatprep.subr.bf16.mxu0 0
        %393 = vmatpush1.bf16.msra.mxu0 0
        %394 = vmatprep.subr.bf16.mxu0 0
        %395 = vmatpush1.bf16.msra.mxu0 0
        %396 = vmatprep.subr.bf16.mxu0 0
        %397 = vmatpush1.bf16.msra.mxu0 0
        %398 = vmatprep.subr.bf16.mxu0 %v332
        %399 = vmatpush1.bf16.msra.mxu0 %v331
        %400 = vmatprep.subr.bf16.mxu0 %v328
        %401 = vmatpush1.bf16.msra.mxu0 %v327
        %402 = vmatprep.subr.bf16.mxu0 0
        %403 = vmatpush2.bf16.msra.mxu0 0
        %404 = vmatprep.subr.bf16.mxu0 0
        %405 = vmatpush2.bf16.msra.mxu0 0
        %406 = vmatprep.subr.bf16.mxu0 0
        %407 = vmatpush2.bf16.msra.mxu0 0
        %408 = vmatprep.subr.bf16.mxu0 0
        %409 = vmatpush2.bf16.msra.mxu0 0
        %410 = vmatprep.subr.bf16.mxu0 0
        %411 = vmatpush2.bf16.msra.mxu0 0
        %412 = vmatprep.subr.bf16.mxu0 0
        %413 = vmatpush2.bf16.msra.mxu0 0
        %414 = vmatprep.subr.bf16.mxu0 0
        %415 = vmatpush2.bf16.msra.mxu0 0
        %416 = vmatprep.subr.bf16.mxu0 0
        %417 = vmatpush2.bf16.msra.mxu0 0
        %418 = vmatprep.mubr.bf16.mxu0 0
        %419 = vmatmul.mubr.bf16.gmra.mxu0 %v343
        %v420 = vpop.f32.mrf.mxu0
        %v421 = vadd.f32 0.0, %v420
        %v422 = vpop.f32.mrf.mxu0
        %v423 = vadd.f32 0.0, %v422
        %v424 = vpop.f32.mrf.mxu0
        %v425 = vpop.f32.mrf.mxu0
        %426 = vdwg.mxu0
        %v429 = vunpack.c.l.b16 %v290
        %v430 = vunpack.c.h.b16 %v290
        %v431 = vunpack.c.l.b16 %v291
        %v432 = vunpack.c.h.b16 %v291
        %v433 = vpack.c.b16 %v429, %v429
        %v434 = vpack.c.b16 %v430, %v430
        %v435 = vpack.c.b16 %v431, %v431
        %v436 = vpack.c.b16 %v432, %v432
        %vm437 = vcmask 64512
        %v439 = vsel %vm437, %v289, 0
        %vm441 = vcmask 1043456
        %v443 = vsel %vm441, %v433, 0
        %v446 = vsel %vm441, %v434, 0
        %v449 = vsel %vm441, %v435, 0
        %v452 = vsel %vm441, %v436, 0
        %454 = vmatprep.subr.bf16.mxu0 0
        %455 = vmatpush1.bf16.msra.mxu0 0
        %456 = vmatprep.subr.bf16.mxu0 0
        %457 = vmatpush1.bf16.msra.mxu0 0
        %458 = vmatprep.subr.bf16.mxu0 0
        %459 = vmatpush1.bf16.msra.mxu0 0
        %460 = vmatprep.subr.bf16.mxu0 0
        %461 = vmatpush1.bf16.msra.mxu0 0
        %462 = vmatprep.subr.bf16.mxu0 0
        %463 = vmatpush1.bf16.msra.mxu0 0
        %464 = vmatprep.subr.bf16.mxu0 0
        %465 = vmatpush1.bf16.msra.mxu0 0
        %466 = vmatprep.subr.bf16.mxu0 0
        %467 = vmatpush1.bf16.msra.mxu0 0
        %468 = vmatprep.subr.bf16.mxu0 %v446
        %469 = vmatpush1.bf16.msra.mxu0 %v443
        %470 = vmatprep.subr.bf16.mxu0 0
        %471 = vmatpush2.bf16.msra.mxu0 0
        %472 = vmatprep.subr.bf16.mxu0 0
        %473 = vmatpush2.bf16.msra.mxu0 0
        %474 = vmatprep.subr.bf16.mxu0 0
        %475 = vmatpush2.bf16.msra.mxu0 0
        %476 = vmatprep.subr.bf16.mxu0 0
        %477 = vmatpush2.bf16.msra.mxu0 0
        %478 = vmatprep.subr.bf16.mxu0 0
        %479 = vmatpush2.bf16.msra.mxu0 0
        %480 = vmatprep.subr.bf16.mxu0 0
        %481 = vmatpush2.bf16.msra.mxu0 0
        %482 = vmatprep.subr.bf16.mxu0 0
        %483 = vmatpush2.bf16.msra.mxu0 0
        %484 = vmatprep.subr.bf16.mxu0 0
        %485 = vmatpush2.bf16.msra.mxu0 0
        %486 = vmatprep.mubr.bf16.mxu0 0
        %487 = vmatmul.mubr.bf16.gmra.mxu0 %v439
        %v488 = vpop.f32.mrf.mxu0
        %v489 = vadd.f32 %v380, %v488
        %v490 = vpop.f32.mrf.mxu0
        %v491 = vadd.f32 %v382, %v490
        %v492 = vpop.f32.mrf.mxu0
        %v493 = vpop.f32.mrf.mxu0
        %494 = vdwg.mxu0
        %495 = vmatprep.subr.bf16.mxu0 0
        %496 = vmatpush1.bf16.msra.mxu0 0
        %497 = vmatprep.subr.bf16.mxu0 0
        %498 = vmatpush1.bf16.msra.mxu0 0
        %499 = vmatprep.subr.bf16.mxu0 0
        %500 = vmatpush1.bf16.msra.mxu0 0
        %501 = vmatprep.subr.bf16.mxu0 0
        %502 = vmatpush1.bf16.msra.mxu0 0
        %503 = vmatprep.subr.bf16.mxu0 0
        %504 = vmatpush1.bf16.msra.mxu0 0
        %505 = vmatprep.subr.bf16.mxu0 0
        %506 = vmatpush1.bf16.msra.mxu0 0
        %507 = vmatprep.subr.bf16.mxu0 0
        %508 = vmatpush1.bf16.msra.mxu0 0
        %509 = vmatprep.subr.bf16.mxu0 %v452
        %510 = vmatpush1.bf16.msra.mxu0 %v449
        %511 = vmatprep.subr.bf16.mxu0 0
        %512 = vmatpush2.bf16.msra.mxu0 0
        %513 = vmatprep.subr.bf16.mxu0 0
        %514 = vmatpush2.bf16.msra.mxu0 0
        %515 = vmatprep.subr.bf16.mxu0 0
        %516 = vmatpush2.bf16.msra.mxu0 0
        %517 = vmatprep.subr.bf16.mxu0 0
        %518 = vmatpush2.bf16.msra.mxu0 0
        %519 = vmatprep.subr.bf16.mxu0 0
        %520 = vmatpush2.bf16.msra.mxu0 0
        %521 = vmatprep.subr.bf16.mxu0 0
        %522 = vmatpush2.bf16.msra.mxu0 0
        %523 = vmatprep.subr.bf16.mxu0 0
        %524 = vmatpush2.bf16.msra.mxu0 0
        %525 = vmatprep.subr.bf16.mxu0 0
        %526 = vmatpush2.bf16.msra.mxu0 0
        %527 = vmatprep.mubr.bf16.mxu0 0
        %528 = vmatmul.mubr.bf16.gmra.mxu0 %v439
        %v529 = vpop.f32.mrf.mxu0
        %v530 = vadd.f32 %v421, %v529
        %v531 = vpop.f32.mrf.mxu0
        %v532 = vadd.f32 %v423, %v531
        %v533 = vpop.f32.mrf.mxu0
        %v534 = vpop.f32.mrf.mxu0
        %535 = vdwg.mxu0
        %v536 = vld [vmem:[%s280] sm:$0xf]
        %v538 = vlaneseq
        %v539 = vshrl.u32 %v538, 7
        %v540 = vsub.s32 0, %v539
        %v541 = vrot.slane %v536, %v540
        %v542 = vlaneseq
        %v543 = vshrl.u32 %v542, 7
        %v544 = vsub.s32 1, %v543
        %v545 = vrot.slane %v536, %v544
        %v546 = vlaneseq
        %v547 = vshrl.u32 %v546, 7
        %v548 = vsub.s32 2, %v547
        %v549 = vrot.slane %v536, %v548
        %v550 = vlaneseq
        %v551 = vshrl.u32 %v550, 7
        %v552 = vsub.s32 3, %v551
        %v553 = vrot.slane %v536, %v552
        %v558 = vadd.f32 %v489, %v541
        %v559 = vadd.f32 %v491, %v545
        %v560 = vadd.f32 %v530, %v549
        %v561 = vadd.f32 %v532, %v553
        %562 = vst [vmem:[%s286] sm:$0xff] %v558
        %563 = vst [vmem:[%s286 + $0x8] sm:$0xff] %v559
        %564 = vst [vmem:[%s286 + $0x10] sm:$0xff] %v560
        %565 = vst [vmem:[%s286 + $0x18] sm:$0xff] %v561
        %s566 = smul.u32 4, %s19
        %p567 = scmp.lt.s32.totalorder %s566, 7
        %s568 = scalar_select %p567, %s566, 7
        %s569 = smul.addr %s568, 8
        %s570 = scalar_lea.vmem %s5, %s569
        // Predicated region
        $region45: #{simple_baseline_net.1} parent=39 // pred_check
          %p571 = pneg %p157
        $region46: #{simple_baseline_net.1} parent=39 // pred_check_branch
          %573 = sbr.rel (%p571) target = $region48
        $region47: #{simple_baseline_net.1} parent=39 // pred_region
          %s574 = smul.u32 4, %s19
        $region48: #{simple_baseline_net.1} parent=39 // pred_fallthru
          _
      $region40: #{simple_baseline_net.1} parent=5 // pred_fallthru
        _
      %p575 = scmp.le.s32.totalorder 2, %s14
      // Predicated region
      $region49: #{simple_baseline_net.1} parent=5 // pred_check
        %p576 = pneg %p575
      $region50: #{simple_baseline_net.1} parent=5 // pred_check_branch
        %578 = sbr.rel (%p576) target = $region52
      $region51: #{simple_baseline_net.1} parent=5 // pred_region
        %s579 = ssub.s32 %s14, 2
        // Predicated region
        $region53: #{simple_baseline_net.1} parent=51 // pred_check
          %p580 = pneg %p163
        $region54: #{simple_baseline_net.1} parent=51 // pred_check_branch
          %582 = sbr.rel (%p580) target = $region56
        $region55: #{simple_baseline_net.1} parent=51 // pred_region
          %s583 = smul.u32 4, %s20
          %p584 = scmp.lt.s32.totalorder %s583, 7
          %s585 = scalar_select %p584, %s583, 7
          %s586 = smul.addr %s585, 8
          %s587 = scalar_lea.vmem %s5, %s586
        $region56: #{simple_baseline_net.1} parent=51 // pred_fallthru
          _
      $region52: #{simple_baseline_net.1} parent=5 // pred_fallthru
        _
    $region6: #{simple_baseline_net.1} parent=1 // loop_footer
      %s18 = sadd.s32 1, %s14
    $region7: #{simple_baseline_net.1} parent=1 // loop_footer_branch
      %13 = sbr.rel target = $region3
    $region8: #{simple_baseline_net.1} parent=1 // loop_exit
      _
    %588 = vsyncpa [#allocation3], 1
    %s589 = scalar_lea.sflag [#allocation3], 1
    %590 = vsyncpa %s589, 1

</llo_original>
